<compile_context>
chip_gen: v5e
topology: v5e:2x2
jax: 0.10.0
libtpu: 0.0.40
codegen_flags: <defaults>
</compile_context>

<pallas_src>
import jax
import jax.numpy as jnp
from jax import lax
from jax.experimental import pallas as pl
from jax.experimental.pallas import tpu as pltpu


def mlp_kernel(x_ref, w1_ref, b1_ref, w2_ref, b2_ref, o_ref):
    """x [TB, I], w1 [H, I], b1 [1, H], w2 [O, H], b2 [1, O], o [TB, O].

    Computes o = relu(x @ W1^T + b1) @ W2^T + b2 (PyTorch Linear semantics)
    entirely in the natural row-major layout.  The weight transposes are
    expressed as dot_general contractions over dim 1 of both operands, so the
    MXU feed handles them with zero data movement.
    """
    x = x_ref[...]                                              # [TB, I]
    h = lax.dot_general(x, w1_ref[...],
                        dimension_numbers=(((1,), (1,)), ((), ())),
                        preferred_element_type=jnp.float32)     # [TB, H]
    h = jnp.maximum(h + b1_ref[...], 0.0)                       # bias + ReLU (VPU)
    y = lax.dot_general(h, w2_ref[...],
                        dimension_numbers=(((1,), (1,)), ((), ())),
                        preferred_element_type=jnp.float32)     # [TB, O]
    o_ref[...] = (y + b2_ref[...]).astype(o_ref.dtype)


def _round_up(n: int, m: int) -> int:
    return ((n + m - 1) // m) * m


def _choose_batch_tile(B: int, block_b: int, megacore_min_batch: int = 1024) -> int:
    """Pick the batch-tile size (second-to-last block dim -> multiple of 8)."""
    if B <= block_b:
        if B >= megacore_min_batch:
            # >= 2 grid steps so the "parallel" axis feeds both v7x
            # TensorCores; each half is still >= 512 rows (near roofline).
            return min(B, _round_up(pl.cdiv(B, 2), 8))
        return B            # one big step: no pipeline fill/drain for small B
    return max(8, (block_b // 8) * 8)


def bit_encryption_forward(x, w1, b1, w2, b2, *, block_b=1024):
    """Forward pass of BitEncryptionModule: y = relu(x W1^T + b1) W2^T + b2.

    Args:
      x:  [B, I]  input, row-major (PyTorch semantics).  Passing bf16 halves
          the dominant streamed HBM traffic; matmuls still accumulate in f32.
      w1: [H, I]  fc1 weight (PyTorch [out, in] layout).
      b1: [H]     fc1 bias.
      w2: [O, H]  fc2 weight.
      b2: [O]     fc2 bias.
      block_b: max batch-tile size.  Per-step VMEM is ~ tb*(I+H+O)*4 bytes
          double-buffered, well within v5e's 16 MiB scoped default.

    Returns:
      [B, O] output in x.dtype.
    """
    B, I = x.shape
    H = w1.shape[0]
    O = w2.shape[0]

    # Biases as rows so they broadcast over the [tb, H] / [tb, O] tiles.
    b1r = b1.reshape(1, H)
    b2r = b2.reshape(1, O)

    tb = _choose_batch_tile(B, block_b)
    nb = pl.cdiv(B, tb)

    act_bytes = jnp.dtype(x.dtype).itemsize
    w_bytes = jnp.dtype(w1.dtype).itemsize
    cost = pl.CostEstimate(
        flops=2 * B * (I * H + H * O),
        transcendentals=0,
        bytes_accessed=(B * I + B * O) * act_bytes
                       + (I * H + H + H * O + O) * w_bytes,
    )

    return pl.pallas_call(
        mlp_kernel,
        out_shape=jax.ShapeDtypeStruct((B, O), x.dtype),
        grid=(nb,),
        in_specs=[
            pl.BlockSpec((tb, I), lambda i: (i, 0)),   # x tile, streamed over B
            pl.BlockSpec((H, I), lambda i: (0, 0)),    # w1, VMEM-resident
            pl.BlockSpec((1, H), lambda i: (0, 0)),    # b1
            pl.BlockSpec((O, H), lambda i: (0, 0)),    # w2
            pl.BlockSpec((1, O), lambda i: (0, 0)),    # b2
        ],
        out_specs=pl.BlockSpec((tb, O), lambda i: (i, 0)),
        compiler_params=pltpu.CompilerParams(
            dimension_semantics=("parallel",),         # megacore when nb >= 2
        ),
        cost_estimate=cost,
    )(x, w1, b1r, w2, b2r)


def init_params(key, input_size=10, hidden_size=20, output_size=10):
    """Deterministic init mimicking nn.Linear default (uniform +/- 1/sqrt(fan_in)).

    Weights in PyTorch [out, in] layout; biases as 1-D vectors.
    """
    k1, k2, k3, k4 = jax.random.split(key, 4)
    bound1 = 1.0 / jnp.sqrt(input_size)
    bound2 = 1.0 / jnp.sqrt(hidden_size)
    w1 = jax.random.uniform(k1, (hidden_size, input_size), jnp.float32,
                            -bound1, bound1)
    b1 = jax.random.uniform(k2, (hidden_size,), jnp.float32, -bound1, bound1)
    w2 = jax.random.uniform(k3, (output_size, hidden_size), jnp.float32,
                            -bound2, bound2)
    b2 = jax.random.uniform(k4, (output_size,), jnp.float32, -bound2, bound2)
    return w1, b1, w2, b2


if __name__ == "__main__":
    key = jax.random.PRNGKey(0)
    kx, kp = jax.random.split(key)

    B, I, H, O = 512, 10, 20, 10
    x = jax.random.normal(kx, (B, I), dtype=jnp.float32)
    w1, b1, w2, b2 = init_params(kp, I, H, O)

    # Reference (plain JAX, PyTorch semantics).
    ref = jnp.maximum(x @ w1.T + b1, 0.0) @ w2.T + b2

    # Default path: single grid step (B <= block_b), fully transpose-free.
    out = jax.block_until_ready(bit_encryption_forward(x, w1, b1, w2, b2))
    assert out.shape == (B, O)
    assert jnp.allclose(out, ref, atol=1e-5, rtol=1e-5)

    # Tiled path (2 pipelined grid steps) — exercises the streamed-batch grid.
    out_tiled = jax.block_until_ready(
        bit_encryption_forward(x, w1, b1, w2, b2, block_b=256))
    assert jnp.allclose(out_tiled, ref, atol=1e-5, rtol=1e-5)

    print("KERNEL_OK")
</pallas_src>

<mosaic_0001>
module attributes {stable_mosaic.version = 11 : i64} {
  func.func @mlp_kernel(%arg0: i32, %arg1: memref<512x10xf32, #tpu.memory_space<vmem>>, %arg2: memref<20x10xf32, #tpu.memory_space<vmem>>, %arg3: memref<1x20xf32, #tpu.memory_space<vmem>>, %arg4: memref<10x20xf32, #tpu.memory_space<vmem>>, %arg5: memref<1x10xf32, #tpu.memory_space<vmem>>, %arg6: memref<512x10xf32, #tpu.memory_space<vmem>>) attributes {dimension_semantics = [#tpu.dimension_semantics<parallel>], iteration_bounds = array<i64: 1>, scalar_prefetch = 0 : i64, scratch_operands = 0 : i64, tpu.core_type = #tpu.core_type<tc>, window_params = [{transform_indices = @transform_0, window_bounds = array<i64: 512, 10>}, {pipeline_mode = #tpu.pipeline_mode<synchronous>, transform_indices = @transform_1, window_bounds = array<i64: 20, 10>}, {pipeline_mode = #tpu.pipeline_mode<synchronous>, transform_indices = @transform_2, window_bounds = array<i64: 1, 20>}, {pipeline_mode = #tpu.pipeline_mode<synchronous>, transform_indices = @transform_3, window_bounds = array<i64: 10, 20>}, {pipeline_mode = #tpu.pipeline_mode<synchronous>, transform_indices = @transform_4, window_bounds = array<i64: 1, 10>}, {transform_indices = @transform_5, window_bounds = array<i64: 512, 10>}]} {
    %c0 = arith.constant 0 : index
    %c0_0 = arith.constant 0 : index
    %0 = vector.load %arg1[%c0, %c0_0] : memref<512x10xf32, #tpu.memory_space<vmem>>, vector<512x10xf32>
    %c0_1 = arith.constant 0 : index
    %c0_2 = arith.constant 0 : index
    %1 = vector.load %arg2[%c0_1, %c0_2] : memref<20x10xf32, #tpu.memory_space<vmem>>, vector<20x10xf32>
    %cst = arith.constant dense<0.000000e+00> : vector<512x20xf32>
    %2 = tpu.matmul %0, %1, %cst {dimension_numbers = #tpu.dot_dimension_numbers<[1], [1], [0], [0], [0, 0, 1, 0], [], []>} : vector<512x10xf32>, vector<20x10xf32>, vector<512x20xf32> -> vector<512x20xf32>
    %c0_3 = arith.constant 0 : index
    %c0_4 = arith.constant 0 : index
    %3 = vector.load %arg3[%c0_3, %c0_4] : memref<1x20xf32, #tpu.memory_space<vmem>>, vector<1x20xf32>
    %4 = vector.broadcast %3 : vector<1x20xf32> to vector<512x20xf32>
    %5 = arith.addf %2, %4 : vector<512x20xf32>
    %cst_5 = arith.constant 0.000000e+00 : f32
    %6 = vector.broadcast %cst_5 : f32 to vector<512x20xf32>
    %7 = arith.maximumf %5, %6 : vector<512x20xf32>
    %c0_6 = arith.constant 0 : index
    %c0_7 = arith.constant 0 : index
    %8 = vector.load %arg4[%c0_6, %c0_7] : memref<10x20xf32, #tpu.memory_space<vmem>>, vector<10x20xf32>
    %cst_8 = arith.constant dense<0.000000e+00> : vector<512x10xf32>
    %9 = tpu.matmul %7, %8, %cst_8 {dimension_numbers = #tpu.dot_dimension_numbers<[1], [1], [0], [0], [0, 0, 1, 0], [], []>} : vector<512x20xf32>, vector<10x20xf32>, vector<512x10xf32> -> vector<512x10xf32>
    %c0_9 = arith.constant 0 : index
    %c0_10 = arith.constant 0 : index
    %10 = vector.load %arg5[%c0_9, %c0_10] : memref<1x10xf32, #tpu.memory_space<vmem>>, vector<1x10xf32>
    %11 = vector.broadcast %10 : vector<1x10xf32> to vector<512x10xf32>
    %12 = arith.addf %9, %11 : vector<512x10xf32>
    %c0_11 = arith.constant 0 : index
    %c0_12 = arith.constant 0 : index
    %13 = vector.load %arg6[%c0_11, %c0_12] : memref<512x10xf32, #tpu.memory_space<vmem>>, vector<512x10xf32>
    tpu.vector_store %arg6[%c0_11, %c0_12], %12 {strides = array<i32>} : memref<512x10xf32, #tpu.memory_space<vmem>>, vector<512x10xf32>,
    return
  }
  func.func @transform_0(%arg0: i32) -> (i32, i32) {
    %c0_i32 = arith.constant 0 : i32
    %c0_i32_0 = arith.constant 0 : i32
    return %arg0, %c0_i32 : i32, i32
  }
  func.func @transform_1(%arg0: i32) -> (i32, i32) {
    %c0_i32 = arith.constant 0 : i32
    %c0_i32_0 = arith.constant 0 : i32
    %c0_i32_1 = arith.constant 0 : i32
    return %c0_i32, %c0_i32_0 : i32, i32
  }
  func.func @transform_2(%arg0: i32) -> (i32, i32) {
    %c0_i32 = arith.constant 0 : i32
    %c0_i32_0 = arith.constant 0 : i32
    %c0_i32_1 = arith.constant 0 : i32
    return %c0_i32, %c0_i32_0 : i32, i32
  }
  func.func @transform_3(%arg0: i32) -> (i32, i32) {
    %c0_i32 = arith.constant 0 : i32
    %c0_i32_0 = arith.constant 0 : i32
    %c0_i32_1 = arith.constant 0 : i32
    return %c0_i32, %c0_i32_0 : i32, i32
  }
  func.func @transform_4(%arg0: i32) -> (i32, i32) {
    %c0_i32 = arith.constant 0 : i32
    %c0_i32_0 = arith.constant 0 : i32
    %c0_i32_1 = arith.constant 0 : i32
    return %c0_i32, %c0_i32_0 : i32, i32
  }
  func.func @transform_5(%arg0: i32) -> (i32, i32) {
    %c0_i32 = arith.constant 0 : i32
    %c0_i32_0 = arith.constant 0 : i32
    return %arg0, %c0_i32 : i32, i32
  }
}

</mosaic_0001>

<llo_original>
// kernel: tpu_custom_call.1
$region0: #{tpu_custom_call.1}
  #allocation0 [shape = 'u32[]', space=smem, size = 0x4, offset = 0x4, fixed_abs, tag = 'smem constant byte address 0x4 - core index']
  #allocation1 [shape = 'u32[72,128]{1,0:T(1,128)}', space=vmem, size = 0x9000, scoped, tag = 'internal scratch']
  %s0 = inlined_call_operand.vmem [shape: f32[512,10], index: 0, kind: input, shape index: {}]
  %s1 = inlined_call_operand.vmem [shape: f32[20,10], index: 1, kind: input, shape index: {}]
  %s2 = inlined_call_operand.vmem [shape: f32[1,20], index: 2, kind: input, shape index: {}]
  %s3 = inlined_call_operand.vmem [shape: f32[10,20], index: 3, kind: input, shape index: {}]
  %s4 = inlined_call_operand.vmem [shape: f32[1,10], index: 4, kind: input, shape index: {}]
  %s5 = inlined_call_operand.vmem [shape: f32[512,10], index: 5, kind: output, shape index: {}]
  %s6 = sld [smem:[#allocation0]]
  $region30: #{tpu_custom_call.1} parent=0
    _
  %s8 = ssub.s32 1, %s6
  %s9 = scalar_select 0, %s8, %s6
  // Predicated region
  $region2: #{tpu_custom_call.1} parent=0 // pred_check
    _
  $region3: #{tpu_custom_call.1} parent=0 // pred_check_branch
    %11 = sbr.rel (0) target = $region5
  $region4: #{tpu_custom_call.1} parent=0 // pred_region
    _
  $region5: #{tpu_custom_call.1} parent=0 // pred_fallthru
    _
  // Predicated region
  $region6: #{tpu_custom_call.1} parent=0 // pred_check
    _
  $region7: #{tpu_custom_call.1} parent=0 // pred_check_branch
    %13 = sbr.rel (0) target = $region9
  $region8: #{tpu_custom_call.1} parent=0 // pred_region
    _
  $region9: #{tpu_custom_call.1} parent=0 // pred_fallthru
    _
  // Predicated region
  $region10: #{tpu_custom_call.1} parent=0 // pred_check
    _
  $region11: #{tpu_custom_call.1} parent=0 // pred_check_branch
    %15 = sbr.rel (0) target = $region13
  $region12: #{tpu_custom_call.1} parent=0 // pred_region
    _
  $region13: #{tpu_custom_call.1} parent=0 // pred_fallthru
    _
  // Predicated region
  $region14: #{tpu_custom_call.1} parent=0 // pred_check
    _
  $region15: #{tpu_custom_call.1} parent=0 // pred_check_branch
    %17 = sbr.rel (0) target = $region17
  $region16: #{tpu_custom_call.1} parent=0 // pred_region
    _
  $region17: #{tpu_custom_call.1} parent=0 // pred_fallthru
    _
  // Predicated region
  $region18: #{tpu_custom_call.1} parent=0 // pred_check
    _
  $region19: #{tpu_custom_call.1} parent=0 // pred_check_branch
    %19 = sbr.rel (0) target = $region21
  $region20: #{tpu_custom_call.1} parent=0 // pred_region
    _
  $region21: #{tpu_custom_call.1} parent=0 // pred_fallthru
    _
  %v20 = vld [vmem:[%s0] sm:$0xff]
  %v21 = vld [vmem:[%s0 + $0x8] sm:$0xff]
  %v22 = vld [vmem:[%s0 + $0x10] sm:$0xff]
  %v23 = vld [vmem:[%s0 + $0x18] sm:$0xff]
  %v24 = vld [vmem:[%s0 + $0x20] sm:$0xff]
  %v25 = vld [vmem:[%s0 + $0x28] sm:$0xff]
  %v26 = vld [vmem:[%s0 + $0x30] sm:$0xff]
  %v27 = vld [vmem:[%s0 + $0x38] sm:$0xff]
  %v28 = vld [vmem:[%s0 + $0x40] sm:$0xff]
  %v29 = vld [vmem:[%s0 + $0x48] sm:$0xff]
  %v30 = vld [vmem:[%s0 + $0x50] sm:$0xff]
  %v31 = vld [vmem:[%s0 + $0x58] sm:$0xff]
  %v32 = vld [vmem:[%s0 + $0x60] sm:$0xff]
  %v33 = vld [vmem:[%s0 + $0x68] sm:$0xff]
  %v34 = vld [vmem:[%s0 + $0x70] sm:$0xff]
  %v35 = vld [vmem:[%s0 + $0x78] sm:$0xff]
  %v36 = vld [vmem:[%s0 + $0x80] sm:$0xff]
  %v37 = vld [vmem:[%s0 + $0x88] sm:$0xff]
  %v38 = vld [vmem:[%s0 + $0x90] sm:$0xff]
  %v39 = vld [vmem:[%s0 + $0x98] sm:$0xff]
  %v40 = vld [vmem:[%s0 + $0xa0] sm:$0xff]
  %v41 = vld [vmem:[%s0 + $0xa8] sm:$0xff]
  %v42 = vld [vmem:[%s0 + $0xb0] sm:$0xff]
  %v43 = vld [vmem:[%s0 + $0xb8] sm:$0xff]
  %v44 = vld [vmem:[%s0 + $0xc0] sm:$0xff]
  %v45 = vld [vmem:[%s0 + $0xc8] sm:$0xff]
  %v46 = vld [vmem:[%s0 + $0xd0] sm:$0xff]
  %v47 = vld [vmem:[%s0 + $0xd8] sm:$0xff]
  %v48 = vld [vmem:[%s0 + $0xe0] sm:$0xff]
  %v49 = vld [vmem:[%s0 + $0xe8] sm:$0xff]
  %v50 = vld [vmem:[%s0 + $0xf0] sm:$0xff]
  %v51 = vld [vmem:[%s0 + $0xf8] sm:$0xff]
  %v52 = vld [vmem:[%s0 + $0x100] sm:$0xff]
  %v53 = vld [vmem:[%s0 + $0x108] sm:$0xff]
  %v54 = vld [vmem:[%s0 + $0x110] sm:$0xff]
  %v55 = vld [vmem:[%s0 + $0x118] sm:$0xff]
  %v56 = vld [vmem:[%s0 + $0x120] sm:$0xff]
  %v57 = vld [vmem:[%s0 + $0x128] sm:$0xff]
  %v58 = vld [vmem:[%s0 + $0x130] sm:$0xff]
  %v59 = vld [vmem:[%s0 + $0x138] sm:$0xff]
  %v60 = vld [vmem:[%s0 + $0x140] sm:$0xff]
  %v61 = vld [vmem:[%s0 + $0x148] sm:$0xff]
  %v62 = vld [vmem:[%s0 + $0x150] sm:$0xff]
  %v63 = vld [vmem:[%s0 + $0x158] sm:$0xff]
  %v64 = vld [vmem:[%s0 + $0x160] sm:$0xff]
  %v65 = vld [vmem:[%s0 + $0x168] sm:$0xff]
  %v66 = vld [vmem:[%s0 + $0x170] sm:$0xff]
  %v67 = vld [vmem:[%s0 + $0x178] sm:$0xff]
  %v68 = vld [vmem:[%s0 + $0x180] sm:$0xff]
  %v69 = vld [vmem:[%s0 + $0x188] sm:$0xff]
  %v70 = vld [vmem:[%s0 + $0x190] sm:$0xff]
  %v71 = vld [vmem:[%s0 + $0x198] sm:$0xff]
  %v72 = vld [vmem:[%s0 + $0x1a0] sm:$0xff]
  %v73 = vld [vmem:[%s0 + $0x1a8] sm:$0xff]
  %v74 = vld [vmem:[%s0 + $0x1b0] sm:$0xff]
  %v75 = vld [vmem:[%s0 + $0x1b8] sm:$0xff]
  %v76 = vld [vmem:[%s0 + $0x1c0] sm:$0xff]
  %v77 = vld [vmem:[%s0 + $0x1c8] sm:$0xff]
  %v78 = vld [vmem:[%s0 + $0x1d0] sm:$0xff]
  %v79 = vld [vmem:[%s0 + $0x1d8] sm:$0xff]
  %v80 = vld [vmem:[%s0 + $0x1e0] sm:$0xff]
  %v81 = vld [vmem:[%s0 + $0x1e8] sm:$0xff]
  %v82 = vld [vmem:[%s0 + $0x1f0] sm:$0xff]
  %v83 = vld [vmem:[%s0 + $0x1f8] sm:$0xff]
  %v84 = vld [vmem:[%s1] sm:$0xff]
  %v85 = vld [vmem:[%s1 + $0x8] sm:$0xff]
  %v86 = vld [vmem:[%s1 + $0x10] sm:$0xf]
  %v87 = vld [vmem:[%s2] sm:$0x1]
  %v89 = vperm.slane %v87, 0
  %vm91 = vcmask 80896
  %v93 = vsel %vm91, %v20, 0
  %v96 = vsel %vm91, %v21, 0
  %v99 = vsel %vm91, %v22, 0
  %v102 = vsel %vm91, %v23, 0
  %v105 = vsel %vm91, %v24, 0
  %v108 = vsel %vm91, %v25, 0
  %v111 = vsel %vm91, %v26, 0
  %v114 = vsel %vm91, %v27, 0
  %v117 = vsel %vm91, %v28, 0
  %v120 = vsel %vm91, %v29, 0
  %v123 = vsel %vm91, %v30, 0
  %v126 = vsel %vm91, %v31, 0
  %v129 = vsel %vm91, %v32, 0
  %v132 = vsel %vm91, %v33, 0
  %v135 = vsel %vm91, %v34, 0
  %v138 = vsel %vm91, %v35, 0
  %v141 = vsel %vm91, %v36, 0
  %v144 = vsel %vm91, %v37, 0
  %v147 = vsel %vm91, %v38, 0
  %v150 = vsel %vm91, %v39, 0
  %v153 = vsel %vm91, %v40, 0
  %v156 = vsel %vm91, %v41, 0
  %v159 = vsel %vm91, %v42, 0
  %v162 = vsel %vm91, %v43, 0
  %v165 = vsel %vm91, %v44, 0
  %v168 = vsel %vm91, %v45, 0
  %v171 = vsel %vm91, %v46, 0
  %v174 = vsel %vm91, %v47, 0
  %v177 = vsel %vm91, %v48, 0
  %v180 = vsel %vm91, %v49, 0
  %v183 = vsel %vm91, %v50, 0
  %v186 = vsel %vm91, %v51, 0
  %v189 = vsel %vm91, %v52, 0
  %v192 = vsel %vm91, %v53, 0
  %v195 = vsel %vm91, %v54, 0
  %v198 = vsel %vm91, %v55, 0
  %v201 = vsel %vm91, %v56, 0
  %v204 = vsel %vm91, %v57, 0
  %v207 = vsel %vm91, %v58, 0
  %v210 = vsel %vm91, %v59, 0
  %v213 = vsel %vm91, %v60, 0
  %v216 = vsel %vm91, %v61, 0
  %v219 = vsel %vm91, %v62, 0
  %v222 = vsel %vm91, %v63, 0
  %v225 = vsel %vm91, %v64, 0
  %v228 = vsel %vm91, %v65, 0
  %v231 = vsel %vm91, %v66, 0
  %v234 = vsel %vm91, %v67, 0
  %v237 = vsel %vm91, %v68, 0
  %v240 = vsel %vm91, %v69, 0
  %v243 = vsel %vm91, %v70, 0
  %v246 = vsel %vm91, %v71, 0
  %v249 = vsel %vm91, %v72, 0
  %v252 = vsel %vm91, %v73, 0
  %v255 = vsel %vm91, %v74, 0
  %v258 = vsel %vm91, %v75, 0
  %v261 = vsel %vm91, %v76, 0
  %v264 = vsel %vm91, %v77, 0
  %v267 = vsel %vm91, %v78, 0
  %v270 = vsel %vm91, %v79, 0
  %v273 = vsel %vm91, %v80, 0
  %v276 = vsel %vm91, %v81, 0
  %v279 = vsel %vm91, %v82, 0
  %v282 = vsel %vm91, %v83, 0
  %v285 = vsel %vm91, %v84, 0
  %v288 = vsel %vm91, %v85, 0
  %v291 = vsel %vm91, %v86, 0
  %293 = vmatpush.xpose.msra.mxu0 0.0
  %294 = vmatpush.xpose.msra.mxu0 0.0
  %295 = vmatpush.xpose.msra.mxu0 0.0
  %296 = vmatpush.xpose.msra.mxu0 0.0
  %297 = vmatpush.xpose.msra.mxu0 0.0
  %298 = vmatpush.xpose.msra.mxu0 0.0
  %299 = vmatpush.xpose.msra.mxu0 0.0
  %300 = vmatpush.xpose.msra.mxu0 0.0
  %301 = vmatpush.xpose.msra.mxu0 0.0
  %302 = vmatpush.xpose.msra.mxu0 0.0
  %303 = vmatpush.xpose.msra.mxu0 0.0
  %304 = vmatpush.xpose.msra.mxu0 0.0
  %305 = vmatpush.xpose.msra.mxu0 0.0
  %306 = vmatpush.xpose.msra.mxu0 %v291
  %307 = vmatpush.xpose.msra.mxu0 %v288
  %308 = vmatpush.xpose.msra.mxu0 %v285
  %309 = vmatmul.f32.gmra.mxu0 %v93
  %v310 = vpop.f32.mrf.mxu0
  %v311 = vadd.f32 %v89, %v310
  %312 = vmatmul.f32.gmra.mxu0 %v96
  %v313 = vpop.f32.mrf.mxu0
  %v314 = vadd.f32 %v89, %v313
  %315 = vmatmul.f32.gmra.mxu0 %v99
  %v316 = vpop.f32.mrf.mxu0
  %v317 = vadd.f32 %v89, %v316
  %318 = vmatmul.f32.gmra.mxu0 %v102
  %v319 = vpop.f32.mrf.mxu0
  %v320 = vadd.f32 %v89, %v319
  %321 = vmatmul.f32.gmra.mxu0 %v105
  %v322 = vpop.f32.mrf.mxu0
  %v323 = vadd.f32 %v89, %v322
  %324 = vmatmul.f32.gmra.mxu0 %v108
  %v325 = vpop.f32.mrf.mxu0
  %v326 = vadd.f32 %v89, %v325
  %327 = vmatmul.f32.gmra.mxu0 %v111
  %v328 = vpop.f32.mrf.mxu0
  %v329 = vadd.f32 %v89, %v328
  %330 = vmatmul.f32.gmra.mxu0 %v114
  %v331 = vpop.f32.mrf.mxu0
  %v332 = vadd.f32 %v89, %v331
  %333 = vmatmul.f32.gmra.mxu0 %v117
  %v334 = vpop.f32.mrf.mxu0
  %v335 = vadd.f32 %v89, %v334
  %336 = vmatmul.f32.gmra.mxu0 %v120
  %v337 = vpop.f32.mrf.mxu0
  %v338 = vadd.f32 %v89, %v337
  %339 = vmatmul.f32.gmra.mxu0 %v123
  %v340 = vpop.f32.mrf.mxu0
  %v341 = vadd.f32 %v89, %v340
  %342 = vmatmul.f32.gmra.mxu0 %v126
  %v343 = vpop.f32.mrf.mxu0
  %v344 = vadd.f32 %v89, %v343
  %345 = vmatmul.f32.gmra.mxu0 %v129
  %v346 = vpop.f32.mrf.mxu0
  %v347 = vadd.f32 %v89, %v346
  %348 = vmatmul.f32.gmra.mxu0 %v132
  %v349 = vpop.f32.mrf.mxu0
  %v350 = vadd.f32 %v89, %v349
  %351 = vmatmul.f32.gmra.mxu0 %v135
  %v352 = vpop.f32.mrf.mxu0
  %v353 = vadd.f32 %v89, %v352
  %354 = vmatmul.f32.gmra.mxu0 %v138
  %v355 = vpop.f32.mrf.mxu0
  %v356 = vadd.f32 %v89, %v355
  %357 = vmatmul.f32.gmra.mxu0 %v141
  %v358 = vpop.f32.mrf.mxu0
  %v359 = vadd.f32 %v89, %v358
  %360 = vmatmul.f32.gmra.mxu0 %v144
  %v361 = vpop.f32.mrf.mxu0
  %v362 = vadd.f32 %v89, %v361
  %363 = vmatmul.f32.gmra.mxu0 %v147
  %v364 = vpop.f32.mrf.mxu0
  %v365 = vadd.f32 %v89, %v364
  %366 = vmatmul.f32.gmra.mxu0 %v150
  %v367 = vpop.f32.mrf.mxu0
  %v368 = vadd.f32 %v89, %v367
  %369 = vmatmul.f32.gmra.mxu0 %v153
  %v370 = vpop.f32.mrf.mxu0
  %v371 = vadd.f32 %v89, %v370
  %372 = vmatmul.f32.gmra.mxu0 %v156
  %v373 = vpop.f32.mrf.mxu0
  %v374 = vadd.f32 %v89, %v373
  %375 = vmatmul.f32.gmra.mxu0 %v159
  %v376 = vpop.f32.mrf.mxu0
  %v377 = vadd.f32 %v89, %v376
  %378 = vmatmul.f32.gmra.mxu0 %v162
  %v379 = vpop.f32.mrf.mxu0
  %v380 = vadd.f32 %v89, %v379
  %381 = vmatmul.f32.gmra.mxu0 %v165
  %v382 = vpop.f32.mrf.mxu0
  %v383 = vadd.f32 %v89, %v382
  %384 = vmatmul.f32.gmra.mxu0 %v168
  %v385 = vpop.f32.mrf.mxu0
  %v386 = vadd.f32 %v89, %v385
  %387 = vmatmul.f32.gmra.mxu0 %v171
  %v388 = vpop.f32.mrf.mxu0
  %v389 = vadd.f32 %v89, %v388
  %390 = vmatmul.f32.gmra.mxu0 %v174
  %v391 = vpop.f32.mrf.mxu0
  %v392 = vadd.f32 %v89, %v391
  %393 = vmatmul.f32.gmra.mxu0 %v177
  %v394 = vpop.f32.mrf.mxu0
  %v395 = vadd.f32 %v89, %v394
  %396 = vmatmul.f32.gmra.mxu0 %v180
  %v397 = vpop.f32.mrf.mxu0
  %v398 = vadd.f32 %v89, %v397
  %399 = vmatmul.f32.gmra.mxu0 %v183
  %v400 = vpop.f32.mrf.mxu0
  %v401 = vadd.f32 %v89, %v400
  %402 = vmatmul.f32.gmra.mxu0 %v186
  %v403 = vpop.f32.mrf.mxu0
  %v404 = vadd.f32 %v89, %v403
  %405 = vmatmul.f32.gmra.mxu0 %v189
  %v406 = vpop.f32.mrf.mxu0
  %v407 = vadd.f32 %v89, %v406
  %408 = vmatmul.f32.gmra.mxu0 %v192
  %v409 = vpop.f32.mrf.mxu0
  %v410 = vadd.f32 %v89, %v409
  %411 = vmatmul.f32.gmra.mxu0 %v195
  %v412 = vpop.f32.mrf.mxu0
  %v413 = vadd.f32 %v89, %v412
  %414 = vmatmul.f32.gmra.mxu0 %v198
  %v415 = vpop.f32.mrf.mxu0
  %v416 = vadd.f32 %v89, %v415
  %417 = vmatmul.f32.gmra.mxu0 %v201
  %v418 = vpop.f32.mrf.mxu0
  %v419 = vadd.f32 %v89, %v418
  %420 = vmatmul.f32.gmra.mxu0 %v204
  %v421 = vpop.f32.mrf.mxu0
  %v422 = vadd.f32 %v89, %v421
  %423 = vmatmul.f32.gmra.mxu0 %v207
  %v424 = vpop.f32.mrf.mxu0
  %v425 = vadd.f32 %v89, %v424
  %426 = vmatmul.f32.gmra.mxu0 %v210
  %v427 = vpop.f32.mrf.mxu0
  %v428 = vadd.f32 %v89, %v427
  %429 = vmatmul.f32.gmra.mxu0 %v213
  %v430 = vpop.f32.mrf.mxu0
  %v431 = vadd.f32 %v89, %v430
  %432 = vmatmul.f32.gmra.mxu0 %v216
  %v433 = vpop.f32.mrf.mxu0
  %v434 = vadd.f32 %v89, %v433
  %435 = vmatmul.f32.gmra.mxu0 %v219
  %v436 = vpop.f32.mrf.mxu0
  %v437 = vadd.f32 %v89, %v436
  %438 = vmatmul.f32.gmra.mxu0 %v222
  %v439 = vpop.f32.mrf.mxu0
  %v440 = vadd.f32 %v89, %v439
  %441 = vmatmul.f32.gmra.mxu0 %v225
  %v442 = vpop.f32.mrf.mxu0
  %v443 = vadd.f32 %v89, %v442
  %444 = vmatmul.f32.gmra.mxu0 %v228
  %v445 = vpop.f32.mrf.mxu0
  %v446 = vadd.f32 %v89, %v445
  %447 = vmatmul.f32.gmra.mxu0 %v231
  %v448 = vpop.f32.mrf.mxu0
  %v449 = vadd.f32 %v89, %v448
  %450 = vmatmul.f32.gmra.mxu0 %v234
  %v451 = vpop.f32.mrf.mxu0
  %v452 = vadd.f32 %v89, %v451
  %453 = vmatmul.f32.gmra.mxu0 %v237
  %v454 = vpop.f32.mrf.mxu0
  %v455 = vadd.f32 %v89, %v454
  %456 = vmatmul.f32.gmra.mxu0 %v240
  %v457 = vpop.f32.mrf.mxu0
  %v458 = vadd.f32 %v89, %v457
  %459 = vmatmul.f32.gmra.mxu0 %v243
  %v460 = vpop.f32.mrf.mxu0
  %v461 = vadd.f32 %v89, %v460
  %462 = vmatmul.f32.gmra.mxu0 %v246
  %v463 = vpop.f32.mrf.mxu0
  %v464 = vadd.f32 %v89, %v463
  %465 = vmatmul.f32.gmra.mxu0 %v249
  %v466 = vpop.f32.mrf.mxu0
  %v467 = vadd.f32 %v89, %v466
  %468 = vmatmul.f32.gmra.mxu0 %v252
  %v469 = vpop.f32.mrf.mxu0
  %v470 = vadd.f32 %v89, %v469
  %471 = vmatmul.f32.gmra.mxu0 %v255
  %v472 = vpop.f32.mrf.mxu0
  %v473 = vadd.f32 %v89, %v472
  %474 = vmatmul.f32.gmra.mxu0 %v258
  %v475 = vpop.f32.mrf.mxu0
  %v476 = vadd.f32 %v89, %v475
  %477 = vmatmul.f32.gmra.mxu0 %v261
  %v478 = vpop.f32.mrf.mxu0
  %v479 = vadd.f32 %v89, %v478
  %480 = vmatmul.f32.gmra.mxu0 %v264
  %v481 = vpop.f32.mrf.mxu0
  %v482 = vadd.f32 %v89, %v481
  %483 = vmatmul.f32.gmra.mxu0 %v267
  %v484 = vpop.f32.mrf.mxu0
  %v485 = vadd.f32 %v89, %v484
  %486 = vmatmul.f32.gmra.mxu0 %v270
  %v487 = vpop.f32.mrf.mxu0
  %v488 = vadd.f32 %v89, %v487
  %489 = vmatmul.f32.gmra.mxu0 %v273
  %v490 = vpop.f32.mrf.mxu0
  %v491 = vadd.f32 %v89, %v490
  %492 = vmatmul.f32.gmra.mxu0 %v276
  %v493 = vpop.f32.mrf.mxu0
  %v494 = vadd.f32 %v89, %v493
  %495 = vmatmul.f32.gmra.mxu0 %v279
  %v496 = vpop.f32.mrf.mxu0
  %v497 = vadd.f32 %v89, %v496
  %498 = vmatmul.f32.gmra.mxu0 %v282
  %v499 = vpop.f32.mrf.mxu0
  %v500 = vadd.f32 %v89, %v499
  %501 = vdwg.mxu0
  %v502 = vmax.f32 %v311, 0.0
  %v503 = vmax.f32 %v314, 0.0
  %v504 = vmax.f32 %v317, 0.0
  %v505 = vmax.f32 %v320, 0.0
  %v506 = vmax.f32 %v323, 0.0
  %v507 = vmax.f32 %v326, 0.0
  %v508 = vmax.f32 %v329, 0.0
  %v509 = vmax.f32 %v332, 0.0
  %v510 = vmax.f32 %v335, 0.0
  %v511 = vmax.f32 %v338, 0.0
  %v512 = vmax.f32 %v341, 0.0
  %v513 = vmax.f32 %v344, 0.0
  %v514 = vmax.f32 %v347, 0.0
  %v515 = vmax.f32 %v350, 0.0
  %v516 = vmax.f32 %v353, 0.0
  %v517 = vmax.f32 %v356, 0.0
  %v518 = vmax.f32 %v359, 0.0
  %v519 = vmax.f32 %v362, 0.0
  %v520 = vmax.f32 %v365, 0.0
  %v521 = vmax.f32 %v368, 0.0
  %v522 = vmax.f32 %v371, 0.0
  %v523 = vmax.f32 %v374, 0.0
  %v524 = vmax.f32 %v377, 0.0
  %v525 = vmax.f32 %v380, 0.0
  %v526 = vmax.f32 %v383, 0.0
  %v527 = vmax.f32 %v386, 0.0
  %v528 = vmax.f32 %v389, 0.0
  %v529 = vmax.f32 %v392, 0.0
  %v530 = vmax.f32 %v395, 0.0
  %v531 = vmax.f32 %v398, 0.0
  %v532 = vmax.f32 %v401, 0.0
  %v533 = vmax.f32 %v404, 0.0
  %v534 = vmax.f32 %v407, 0.0
  %v535 = vmax.f32 %v410, 0.0
  %v536 = vmax.f32 %v413, 0.0
  %v537 = vmax.f32 %v416, 0.0
  %v538 = vmax.f32 %v419, 0.0
  %v539 = vmax.f32 %v422, 0.0
  %v540 = vmax.f32 %v425, 0.0
  %v541 = vmax.f32 %v428, 0.0
  %v542 = vmax.f32 %v431, 0.0
  %v543 = vmax.f32 %v434, 0.0
  %v544 = vmax.f32 %v437, 0.0
  %v545 = vmax.f32 %v440, 0.0
  %v546 = vmax.f32 %v443, 0.0
  %v547 = vmax.f32 %v446, 0.0
  %v548 = vmax.f32 %v449, 0.0
  %v549 = vmax.f32 %v452, 0.0
  %v550 = vmax.f32 %v455, 0.0
  %v551 = vmax.f32 %v458, 0.0
  %v552 = vmax.f32 %v461, 0.0
  %v553 = vmax.f32 %v464, 0.0
  %v554 = vmax.f32 %v467, 0.0
  %v555 = vmax.f32 %v470, 0.0
  %v556 = vmax.f32 %v473, 0.0
  %v557 = vmax.f32 %v476, 0.0
  %v558 = vmax.f32 %v479, 0.0
  %v559 = vmax.f32 %v482, 0.0
  %v560 = vmax.f32 %v485, 0.0
  %v561 = vmax.f32 %v488, 0.0
  %v562 = vmax.f32 %v491, 0.0
  %v563 = vmax.f32 %v494, 0.0
  %v564 = vmax.f32 %v497, 0.0
  %v565 = vmax.f32 %v500, 0.0
  %v566 = vld [vmem:[%s3] sm:$0xff]
  %v567 = vld [vmem:[%s3 + $0x8] sm:$0x3]
  %v568 = vld [vmem:[%s4] sm:$0x1]
  %v570 = vperm.slane %v568, 0
  %vm572 = vcmask 162816
  %v574 = vsel %vm572, %v502, 0
  %v577 = vsel %vm572, %v503, 0
  %v580 = vsel %vm572, %v504, 0
  %v583 = vsel %vm572, %v505, 0
  %v586 = vsel %vm572, %v506, 0
  %v589 = vsel %vm572, %v507, 0
  %v592 = vsel %vm572, %v508, 0
  %v595 = vsel %vm572, %v509, 0
  %v598 = vsel %vm572, %v510, 0
  %v601 = vsel %vm572, %v511, 0
  %v604 = vsel %vm572, %v512, 0
  %v607 = vsel %vm572, %v513, 0
  %v610 = vsel %vm572, %v514, 0
  %v613 = vsel %vm572, %v515, 0
  %v616 = vsel %vm572, %v516, 0
  %v619 = vsel %vm572, %v517, 0
  %v622 = vsel %vm572, %v518, 0
  %v625 = vsel %vm572, %v519, 0
  %v628 = vsel %vm572, %v520, 0
  %v631 = vsel %vm572, %v521, 0
  %v634 = vsel %vm572, %v522, 0
  %v637 = vsel %vm572, %v523, 0
  %v640 = vsel %vm572, %v524, 0
  %v643 = vsel %vm572, %v525, 0
  %v646 = vsel %vm572, %v526, 0
  %v649 = vsel %vm572, %v527, 0
  %v652 = vsel %vm572, %v528, 0
  %v655 = vsel %vm572, %v529, 0
  %v658 = vsel %vm572, %v530, 0
  %v661 = vsel %vm572, %v531, 0
  %v664 = vsel %vm572, %v532, 0
  %v667 = vsel %vm572, %v533, 0
  %v670 = vsel %vm572, %v534, 0
  %v673 = vsel %vm572, %v535, 0
  %v676 = vsel %vm572, %v536, 0
  %v679 = vsel %vm572, %v537, 0
  %v682 = vsel %vm572, %v538, 0
  %v685 = vsel %vm572, %v539, 0
  %v688 = vsel %vm572, %v540, 0
  %v691 = vsel %vm572, %v541, 0
  %v694 = vsel %vm572, %v542, 0
  %v697 = vsel %vm572, %v543, 0
  %v700 = vsel %vm572, %v544, 0
  %v703 = vsel %vm572, %v545, 0
  %v706 = vsel %vm572, %v546, 0
  %v709 = vsel %vm572, %v547, 0
  %v712 = vsel %vm572, %v548, 0
  %v715 = vsel %vm572, %v549, 0
  %v718 = vsel %vm572, %v550, 0
  %v721 = vsel %vm572, %v551, 0
  %v724 = vsel %vm572, %v552, 0
  %v727 = vsel %vm572, %v553, 0
  %v730 = vsel %vm572, %v554, 0
  %v733 = vsel %vm572, %v555, 0
  %v736 = vsel %vm572, %v556, 0
  %v739 = vsel %vm572, %v557, 0
  %v742 = vsel %vm572, %v558, 0
  %v745 = vsel %vm572, %v559, 0
  %v748 = vsel %vm572, %v560, 0
  %v751 = vsel %vm572, %v561, 0
  %v754 = vsel %vm572, %v562, 0
  %v757 = vsel %vm572, %v563, 0
  %v760 = vsel %vm572, %v564, 0
  %v763 = vsel %vm572, %v565, 0
  %v766 = vsel %vm572, %v566, 0
  %v769 = vsel %vm572, %v567, 0
  %771 = vmatpush.xpose.msra.mxu0 0.0
  %772 = vmatpush.xpose.msra.mxu0 0.0
  %773 = vmatpush.xpose.msra.mxu0 0.0
  %774 = vmatpush.xpose.msra.mxu0 0.0
  %775 = vmatpush.xpose.msra.mxu0 0.0
  %776 = vmatpush.xpose.msra.mxu0 0.0
  %777 = vmatpush.xpose.msra.mxu0 0.0
  %778 = vmatpush.xpose.msra.mxu0 0.0
  %779 = vmatpush.xpose.msra.mxu0 0.0
  %780 = vmatpush.xpose.msra.mxu0 0.0
  %781 = vmatpush.xpose.msra.mxu0 0.0
  %782 = vmatpush.xpose.msra.mxu0 0.0
  %783 = vmatpush.xpose.msra.mxu0 0.0
  %784 = vmatpush.xpose.msra.mxu0 0.0
  %785 = vmatpush.xpose.msra.mxu0 %v769
  %786 = vmatpush.xpose.msra.mxu0 %v766
  %787 = vmatmul.f32.gmra.mxu0 %v574
  %v788 = vpop.f32.mrf.mxu0
  %v789 = vadd.f32 %v570, %v788
  %790 = vmatmul.f32.gmra.mxu0 %v577
  %v791 = vpop.f32.mrf.mxu0
  %v792 = vadd.f32 %v570, %v791
  %793 = vmatmul.f32.gmra.mxu0 %v580
  %v794 = vpop.f32.mrf.mxu0
  %v795 = vadd.f32 %v570, %v794
  %796 = vmatmul.f32.gmra.mxu0 %v583
  %v797 = vpop.f32.mrf.mxu0
  %v798 = vadd.f32 %v570, %v797
  %799 = vmatmul.f32.gmra.mxu0 %v586
  %v800 = vpop.f32.mrf.mxu0
  %v801 = vadd.f32 %v570, %v800
  %802 = vmatmul.f32.gmra.mxu0 %v589
  %v803 = vpop.f32.mrf.mxu0
  %v804 = vadd.f32 %v570, %v803
  %805 = vmatmul.f32.gmra.mxu0 %v592
  %v806 = vpop.f32.mrf.mxu0
  %v807 = vadd.f32 %v570, %v806
  %808 = vmatmul.f32.gmra.mxu0 %v595
  %v809 = vpop.f32.mrf.mxu0
  %v810 = vadd.f32 %v570, %v809
  %811 = vmatmul.f32.gmra.mxu0 %v598
  %v812 = vpop.f32.mrf.mxu0
  %v813 = vadd.f32 %v570, %v812
  %814 = vmatmul.f32.gmra.mxu0 %v601
  %v815 = vpop.f32.mrf.mxu0
  %v816 = vadd.f32 %v570, %v815
  %817 = vmatmul.f32.gmra.mxu0 %v604
  %v818 = vpop.f32.mrf.mxu0
  %v819 = vadd.f32 %v570, %v818
  %820 = vmatmul.f32.gmra.mxu0 %v607
  %v821 = vpop.f32.mrf.mxu0
  %v822 = vadd.f32 %v570, %v821
  %823 = vmatmul.f32.gmra.mxu0 %v610
  %v824 = vpop.f32.mrf.mxu0
  %v825 = vadd.f32 %v570, %v824
  %826 = vmatmul.f32.gmra.mxu0 %v613
  %v827 = vpop.f32.mrf.mxu0
  %v828 = vadd.f32 %v570, %v827
  %829 = vmatmul.f32.gmra.mxu0 %v616
  %v830 = vpop.f32.mrf.mxu0
  %v831 = vadd.f32 %v570, %v830
  %832 = vmatmul.f32.gmra.mxu0 %v619
  %v833 = vpop.f32.mrf.mxu0
  %v834 = vadd.f32 %v570, %v833
  %835 = vmatmul.f32.gmra.mxu0 %v622
  %v836 = vpop.f32.mrf.mxu0
  %v837 = vadd.f32 %v570, %v836
  %838 = vmatmul.f32.gmra.mxu0 %v625
  %v839 = vpop.f32.mrf.mxu0
  %v840 = vadd.f32 %v570, %v839
  %841 = vmatmul.f32.gmra.mxu0 %v628
  %v842 = vpop.f32.mrf.mxu0
  %v843 = vadd.f32 %v570, %v842
  %844 = vmatmul.f32.gmra.mxu0 %v631
  %v845 = vpop.f32.mrf.mxu0
  %v846 = vadd.f32 %v570, %v845
  %847 = vmatmul.f32.gmra.mxu0 %v634
  %v848 = vpop.f32.mrf.mxu0
  %v849 = vadd.f32 %v570, %v848
  %850 = vmatmul.f32.gmra.mxu0 %v637
  %v851 = vpop.f32.mrf.mxu0
  %v852 = vadd.f32 %v570, %v851
  %853 = vmatmul.f32.gmra.mxu0 %v640
  %v854 = vpop.f32.mrf.mxu0
  %v855 = vadd.f32 %v570, %v854
  %856 = vmatmul.f32.gmra.mxu0 %v643
  %v857 = vpop.f32.mrf.mxu0
  %v858 = vadd.f32 %v570, %v857
  %859 = vmatmul.f32.gmra.mxu0 %v646
  %v860 = vpop.f32.mrf.mxu0
  %v861 = vadd.f32 %v570, %v860
  %862 = vmatmul.f32.gmra.mxu0 %v649
  %v863 = vpop.f32.mrf.mxu0
  %v864 = vadd.f32 %v570, %v863
  %865 = vmatmul.f32.gmra.mxu0 %v652
  %v866 = vpop.f32.mrf.mxu0
  %v867 = vadd.f32 %v570, %v866
  %868 = vmatmul.f32.gmra.mxu0 %v655
  %v869 = vpop.f32.mrf.mxu0
  %v870 = vadd.f32 %v570, %v869
  %871 = vmatmul.f32.gmra.mxu0 %v658
  %v872 = vpop.f32.mrf.mxu0
  %v873 = vadd.f32 %v570, %v872
  %874 = vmatmul.f32.gmra.mxu0 %v661
  %v875 = vpop.f32.mrf.mxu0
  %v876 = vadd.f32 %v570, %v875
  %877 = vmatmul.f32.gmra.mxu0 %v664
  %v878 = vpop.f32.mrf.mxu0
  %v879 = vadd.f32 %v570, %v878
  %880 = vmatmul.f32.gmra.mxu0 %v667
  %v881 = vpop.f32.mrf.mxu0
  %v882 = vadd.f32 %v570, %v881
  %883 = vmatmul.f32.gmra.mxu0 %v670
  %v884 = vpop.f32.mrf.mxu0
  %v885 = vadd.f32 %v570, %v884
  %886 = vmatmul.f32.gmra.mxu0 %v673
  %v887 = vpop.f32.mrf.mxu0
  %v888 = vadd.f32 %v570, %v887
  %889 = vmatmul.f32.gmra.mxu0 %v676
  %v890 = vpop.f32.mrf.mxu0
  %v891 = vadd.f32 %v570, %v890
  %892 = vmatmul.f32.gmra.mxu0 %v679
  %v893 = vpop.f32.mrf.mxu0
  %v894 = vadd.f32 %v570, %v893
  %895 = vmatmul.f32.gmra.mxu0 %v682
  %v896 = vpop.f32.mrf.mxu0
  %v897 = vadd.f32 %v570, %v896
  %898 = vmatmul.f32.gmra.mxu0 %v685
  %v899 = vpop.f32.mrf.mxu0
  %v900 = vadd.f32 %v570, %v899
  %901 = vmatmul.f32.gmra.mxu0 %v688
  %v902 = vpop.f32.mrf.mxu0
  %v903 = vadd.f32 %v570, %v902
  %904 = vmatmul.f32.gmra.mxu0 %v691
  %v905 = vpop.f32.mrf.mxu0
  %v906 = vadd.f32 %v570, %v905
  %907 = vmatmul.f32.gmra.mxu0 %v694
  %v908 = vpop.f32.mrf.mxu0
  %v909 = vadd.f32 %v570, %v908
  %910 = vmatmul.f32.gmra.mxu0 %v697
  %v911 = vpop.f32.mrf.mxu0
  %v912 = vadd.f32 %v570, %v911
  %913 = vmatmul.f32.gmra.mxu0 %v700
  %v914 = vpop.f32.mrf.mxu0
  %v915 = vadd.f32 %v570, %v914
  %916 = vmatmul.f32.gmra.mxu0 %v703
  %v917 = vpop.f32.mrf.mxu0
  %v918 = vadd.f32 %v570, %v917
  %919 = vmatmul.f32.gmra.mxu0 %v706
  %v920 = vpop.f32.mrf.mxu0
  %v921 = vadd.f32 %v570, %v920
  %922 = vmatmul.f32.gmra.mxu0 %v709
  %v923 = vpop.f32.mrf.mxu0
  %v924 = vadd.f32 %v570, %v923
  %925 = vmatmul.f32.gmra.mxu0 %v712
  %v926 = vpop.f32.mrf.mxu0
  %v927 = vadd.f32 %v570, %v926
  %928 = vmatmul.f32.gmra.mxu0 %v715
  %v929 = vpop.f32.mrf.mxu0
  %v930 = vadd.f32 %v570, %v929
  %931 = vmatmul.f32.gmra.mxu0 %v718
  %v932 = vpop.f32.mrf.mxu0
  %v933 = vadd.f32 %v570, %v932
  %934 = vmatmul.f32.gmra.mxu0 %v721
  %v935 = vpop.f32.mrf.mxu0
  %v936 = vadd.f32 %v570, %v935
  %937 = vmatmul.f32.gmra.mxu0 %v724
  %v938 = vpop.f32.mrf.mxu0
  %v939 = vadd.f32 %v570, %v938
  %940 = vmatmul.f32.gmra.mxu0 %v727
  %v941 = vpop.f32.mrf.mxu0
  %v942 = vadd.f32 %v570, %v941
  %943 = vmatmul.f32.gmra.mxu0 %v730
  %v944 = vpop.f32.mrf.mxu0
  %v945 = vadd.f32 %v570, %v944
  %946 = vmatmul.f32.gmra.mxu0 %v733
  %v947 = vpop.f32.mrf.mxu0
  %v948 = vadd.f32 %v570, %v947
  %949 = vmatmul.f32.gmra.mxu0 %v736
  %v950 = vpop.f32.mrf.mxu0
  %v951 = vadd.f32 %v570, %v950
  %952 = vmatmul.f32.gmra.mxu0 %v739
  %v953 = vpop.f32.mrf.mxu0
  %v954 = vadd.f32 %v570, %v953
  %955 = vmatmul.f32.gmra.mxu0 %v742
  %v956 = vpop.f32.mrf.mxu0
  %v957 = vadd.f32 %v570, %v956
  %958 = vmatmul.f32.gmra.mxu0 %v745
  %v959 = vpop.f32.mrf.mxu0
  %v960 = vadd.f32 %v570, %v959
  %961 = vmatmul.f32.gmra.mxu0 %v748
  %v962 = vpop.f32.mrf.mxu0
  %v963 = vadd.f32 %v570, %v962
  %964 = vmatmul.f32.gmra.mxu0 %v751
  %v965 = vpop.f32.mrf.mxu0
  %v966 = vadd.f32 %v570, %v965
  %967 = vmatmul.f32.gmra.mxu0 %v754
  %v968 = vpop.f32.mrf.mxu0
  %v969 = vadd.f32 %v570, %v968
  %970 = vmatmul.f32.gmra.mxu0 %v757
  %v971 = vpop.f32.mrf.mxu0
  %v972 = vadd.f32 %v570, %v971
  %973 = vmatmul.f32.gmra.mxu0 %v760
  %v974 = vpop.f32.mrf.mxu0
  %v975 = vadd.f32 %v570, %v974
  %976 = vmatmul.f32.gmra.mxu0 %v763
  %v977 = vpop.f32.mrf.mxu0
  %v978 = vadd.f32 %v570, %v977
  %979 = vdwg.mxu0
  %980 = vst.msk [vmem:[%s5] sm:$0xff] %vm91, %v789
  %981 = vst.msk [vmem:[%s5 + $0x8] sm:$0xff] %vm91, %v792
  %982 = vst.msk [vmem:[%s5 + $0x10] sm:$0xff] %vm91, %v795
  %983 = vst.msk [vmem:[%s5 + $0x18] sm:$0xff] %vm91, %v798
  %984 = vst.msk [vmem:[%s5 + $0x20] sm:$0xff] %vm91, %v801
  %985 = vst.msk [vmem:[%s5 + $0x28] sm:$0xff] %vm91, %v804
  %986 = vst.msk [vmem:[%s5 + $0x30] sm:$0xff] %vm91, %v807
  %987 = vst.msk [vmem:[%s5 + $0x38] sm:$0xff] %vm91, %v810
  %988 = vst.msk [vmem:[%s5 + $0x40] sm:$0xff] %vm91, %v813
  %989 = vst.msk [vmem:[%s5 + $0x48] sm:$0xff] %vm91, %v816
  %990 = vst.msk [vmem:[%s5 + $0x50] sm:$0xff] %vm91, %v819
  %991 = vst.msk [vmem:[%s5 + $0x58] sm:$0xff] %vm91, %v822
  %992 = vst.msk [vmem:[%s5 + $0x60] sm:$0xff] %vm91, %v825
  %993 = vst.msk [vmem:[%s5 + $0x68] sm:$0xff] %vm91, %v828
  %994 = vst.msk [vmem:[%s5 + $0x70] sm:$0xff] %vm91, %v831
  %995 = vst.msk [vmem:[%s5 + $0x78] sm:$0xff] %vm91, %v834
  %996 = vst.msk [vmem:[%s5 + $0x80] sm:$0xff] %vm91, %v837
  %997 = vst.msk [vmem:[%s5 + $0x88] sm:$0xff] %vm91, %v840
  %998 = vst.msk [vmem:[%s5 + $0x90] sm:$0xff] %vm91, %v843
  %999 = vst.msk [vmem:[%s5 + $0x98] sm:$0xff] %vm91, %v846
  %1000 = vst.msk [vmem:[%s5 + $0xa0] sm:$0xff] %vm91, %v849
  %1001 = vst.msk [vmem:[%s5 + $0xa8] sm:$0xff] %vm91, %v852
  %1002 = vst.msk [vmem:[%s5 + $0xb0] sm:$0xff] %vm91, %v855
  %1003 = vst.msk [vmem:[%s5 + $0xb8] sm:$0xff] %vm91, %v858
  %1004 = vst.msk [vmem:[%s5 + $0xc0] sm:$0xff] %vm91, %v861
  %1005 = vst.msk [vmem:[%s5 + $0xc8] sm:$0xff] %vm91, %v864
  %1006 = vst.msk [vmem:[%s5 + $0xd0] sm:$0xff] %vm91, %v867
  %1007 = vst.msk [vmem:[%s5 + $0xd8] sm:$0xff] %vm91, %v870
  %1008 = vst.msk [vmem:[%s5 + $0xe0] sm:$0xff] %vm91, %v873
  %1009 = vst.msk [vmem:[%s5 + $0xe8] sm:$0xff] %vm91, %v876
  %1010 = vst.msk [vmem:[%s5 + $0xf0] sm:$0xff] %vm91, %v879
  %1011 = vst.msk [vmem:[%s5 + $0xf8] sm:$0xff] %vm91, %v882
  %1012 = vst.msk [vmem:[%s5 + $0x100] sm:$0xff] %vm91, %v885
  %1013 = vst.msk [vmem:[%s5 + $0x108] sm:$0xff] %vm91, %v888
  %1014 = vst.msk [vmem:[%s5 + $0x110] sm:$0xff] %vm91, %v891
  %1015 = vst.msk [vmem:[%s5 + $0x118] sm:$0xff] %vm91, %v894
  %1016 = vst.msk [vmem:[%s5 + $0x120] sm:$0xff] %vm91, %v897
  %1017 = vst.msk [vmem:[%s5 + $0x128] sm:$0xff] %vm91, %v900
  %1018 = vst.msk [vmem:[%s5 + $0x130] sm:$0xff] %vm91, %v903
  %1019 = vst.msk [vmem:[%s5 + $0x138] sm:$0xff] %vm91, %v906
  %1020 = vst.msk [vmem:[%s5 + $0x140] sm:$0xff] %vm91, %v909
  %1021 = vst.msk [vmem:[%s5 + $0x148] sm:$0xff] %vm91, %v912
  %1022 = vst.msk [vmem:[%s5 + $0x150] sm:$0xff] %vm91, %v915
  %1023 = vst.msk [vmem:[%s5 + $0x158] sm:$0xff] %vm91, %v918
  %1024 = vst.msk [vmem:[%s5 + $0x160] sm:$0xff] %vm91, %v921
  %1025 = vst.msk [vmem:[%s5 + $0x168] sm:$0xff] %vm91, %v924
  %1026 = vst.msk [vmem:[%s5 + $0x170] sm:$0xff] %vm91, %v927
  %1027 = vst.msk [vmem:[%s5 + $0x178] sm:$0xff] %vm91, %v930
  %1028 = vst.msk [vmem:[%s5 + $0x180] sm:$0xff] %vm91, %v933
  %1029 = vst.msk [vmem:[%s5 + $0x188] sm:$0xff] %vm91, %v936
  %1030 = vst.msk [vmem:[%s5 + $0x190] sm:$0xff] %vm91, %v939
  %1031 = vst.msk [vmem:[%s5 + $0x198] sm:$0xff] %vm91, %v942
  %1032 = vst.msk [vmem:[%s5 + $0x1a0] sm:$0xff] %vm91, %v945
  %1033 = vst.msk [vmem:[%s5 + $0x1a8] sm:$0xff] %vm91, %v948
  %1034 = vst.msk [vmem:[%s5 + $0x1b0] sm:$0xff] %vm91, %v951
  %1035 = vst.msk [vmem:[%s5 + $0x1b8] sm:$0xff] %vm91, %v954
  %1036 = vst.msk [vmem:[%s5 + $0x1c0] sm:$0xff] %vm91, %v957
  %1037 = vst.msk [vmem:[%s5 + $0x1c8] sm:$0xff] %vm91, %v960
  %1038 = vst.msk [vmem:[%s5 + $0x1d0] sm:$0xff] %vm91, %v963
  %1039 = vst.msk [vmem:[%s5 + $0x1d8] sm:$0xff] %vm91, %v966
  %1040 = vst.msk [vmem:[%s5 + $0x1e0] sm:$0xff] %vm91, %v969
  %1041 = vst.msk [vmem:[%s5 + $0x1e8] sm:$0xff] %vm91, %v972
  %1042 = vst.msk [vmem:[%s5 + $0x1f0] sm:$0xff] %vm91, %v975
  %1043 = vst.msk [vmem:[%s5 + $0x1f8] sm:$0xff] %vm91, %v978
  // Predicated region
  $region22: #{tpu_custom_call.1} parent=0 // pred_check
    _
  $region23: #{tpu_custom_call.1} parent=0 // pred_check_branch
    %1045 = sbr.rel (0) target = $region25
  $region24: #{tpu_custom_call.1} parent=0 // pred_region
    _
  $region25: #{tpu_custom_call.1} parent=0 // pred_fallthru
    _
  // Predicated region
  $region26: #{tpu_custom_call.1} parent=0 // pred_check
    _
  $region27: #{tpu_custom_call.1} parent=0 // pred_check_branch
    %1047 = sbr.rel (0) target = $region29
  $region28: #{tpu_custom_call.1} parent=0 // pred_region
    _
  $region29: #{tpu_custom_call.1} parent=0 // pred_fallthru
    _

</llo_original>
